<compile_context>
chip_gen: v6e
topology: v6e:2x2x1
jax: 0.10.0
libtpu: 0.0.40
codegen_flags: <defaults>
</compile_context>

<pallas_src>
import functools
import math

import jax
import jax.numpy as jnp
from jax.experimental import pallas as pl
from jax.experimental.pallas import tpu as pltpu


def _make_maxpool2_kernel(W: int, LP: int):
    """2x2 / stride-1 max pool over block rows of packed flattened planes."""

    def kernel(last_col_ref, last_row_ref, x_ref, o_ref):
        # (1, LP) edge masks, compared once at (1, LP).  jnp.where broadcasts
        # them along sublanes (cheap mask broadcast, no int32 blow-up).
        last_col = last_col_ref[...] != 0
        last_row = last_row_ref[...] != 0

        x = x_ref[...]                                      # (TB, LP)

        # Horizontal pass: x[i, j] vs x[i, j+1] (clamped at the right edge).
        right = pltpu.roll(x, shift=LP - 1, axis=1)         # value at p+1
        row_max = jnp.maximum(x, jnp.where(last_col, x, right))

        # Vertical pass: row_max[i, j] vs row_max[i+1, j] (clamped at bottom).
        below = pltpu.roll(row_max, shift=LP - W, axis=1)   # value at p+W
        o_ref[...] = jnp.maximum(row_max, jnp.where(last_row, row_max, below))

    return kernel


def _choose_block_rows(n_rows: int, row_bytes: int, itemsize: int) -> int:
    """Packed-plane rows per grid step.

    Targets: ~0.5-2 MiB of input per block (amortizes ~0.35 us per-step
    overhead, double-buffered in+out stays <= ~8 MiB on every generation),
    >= ~8 grid steps when the problem allows (keeps both v7x TensorCores fed
    with several steps each so DMA overlaps compute), and row counts rounded
    to the dtype's sublane packing (8 for 32-bit, 16 for 16-bit, 32 for 8-bit).
    """
    sub = {1: 32, 2: 16}.get(itemsize, 8)
    if n_rows <= sub:
        return n_rows

    def rnd(r: int) -> int:
        return max(sub, (r // sub) * sub)

    budget_rows = rnd((2 << 20) // max(row_bytes, 1))    # <= ~2 MiB / block
    floor_rows = rnd((512 << 10) // max(row_bytes, 1))   # >= ~512 KiB / block
    steps_cap = rnd(n_rows // 8)                         # aim for >= 8 steps
    tb = max(min(budget_rows, steps_cap), min(floor_rows, budget_rows))
    return min(tb, rnd(n_rows))


@functools.partial(jax.jit, static_argnames=("kernel_size",))
def maxpool_stride1(x: jax.Array, kernel_size: int = 2) -> jax.Array:
    """Pallas TPU equivalent of darknet MaxPoolStride1.forward (NCHW)."""
    if kernel_size != 2:
        # TODO(synk): general kernel_size (pad = stride = k-1) needs strided
        # window gathers; only the canonical stride-1 (kernel_size=2) case is
        # implemented as a Pallas kernel.
        raise NotImplementedError("Pallas MaxPoolStride1 supports kernel_size=2 only")

    assert x.ndim == 4
    B, C, H, W = x.shape
    N = B * C
    L = H * W

    # Pack k whole planes per block row so the lane dimension LP = k*L is a
    # multiple of 128 (lane-dense loads/stores).  The per-plane edge masks
    # neutralize any values that leak across plane seams from the rolls.
    k = 1 if L % 128 == 0 else 128 // math.gcd(L, 128)
    n_pad = pl.cdiv(N, k) * k
    x_flat = x.reshape(N, L)
    if n_pad != N:
        x_flat = jnp.pad(x_flat, ((0, n_pad - N), (0, 0)))
    n_rows = n_pad // k
    LP = k * L
    x_packed = x_flat.reshape(n_rows, LP)

    # Tiny (1, LP) {0,1} edge tables shared by every grid step (compared to
    # bool once per step at (1, LP) inside the kernel).
    pos = jnp.arange(LP, dtype=jnp.int32) % L          # position within plane
    last_col = ((pos % W) == (W - 1)).astype(jnp.int32).reshape(1, LP)
    last_row = ((pos // W) == (H - 1)).astype(jnp.int32).reshape(1, LP)

    tb = _choose_block_rows(n_rows, LP * x.dtype.itemsize, x.dtype.itemsize)
    grid = (pl.cdiv(n_rows, tb),)

    out_packed = pl.pallas_call(
        _make_maxpool2_kernel(W, LP),
        out_shape=jax.ShapeDtypeStruct((n_rows, LP), x.dtype),
        grid_spec=pltpu.PrefetchScalarGridSpec(
            num_scalar_prefetch=0,
            grid=grid,
            in_specs=[
                pl.BlockSpec((1, LP), lambda i: (0, 0)),    # last_col mask
                pl.BlockSpec((1, LP), lambda i: (0, 0)),    # last_row mask
                pl.BlockSpec((tb, LP), lambda i: (i, 0)),   # packed planes
            ],
            out_specs=pl.BlockSpec((tb, LP), lambda i: (i, 0)),
        ),
        compiler_params=pltpu.CompilerParams(
            dimension_semantics=("parallel",),
            vmem_limit_bytes=32 * 1024 * 1024,
        ),
    )(last_col, last_row, x_packed)

    return out_packed.reshape(n_pad, L)[:N].reshape(B, C, H, W)


def maxpool_stride1_ref(x: jax.Array, kernel_size: int = 2) -> jax.Array:
    """Pure-JAX reference mirroring the torch module: replicate pad (right,
    bottom) by k-1, then MaxPool2d(kernel=k, stride=k-1).  Float dtypes only
    (-inf init)."""
    pad = kernel_size - 1
    xp = jnp.pad(x, ((0, 0), (0, 0), (0, pad), (0, pad)), mode="edge")
    return jax.lax.reduce_window(
        xp,
        jnp.array(-jnp.inf, dtype=x.dtype),
        jax.lax.max,
        window_dimensions=(1, 1, kernel_size, kernel_size),
        window_strides=(1, 1, pad, pad),
        padding="VALID",
    )


if __name__ == "__main__":
    k1, k2 = jax.random.split(jax.random.PRNGKey(0))
    kernel_size = 2

    # Canonical small NCHW feature map (L = 256, lane-friendly path).
    x1 = jax.random.normal(k1, (2, 4, 16, 16), dtype=jnp.float32)
    out1 = jax.block_until_ready(maxpool_stride1(x1, kernel_size=kernel_size))
    ref1 = maxpool_stride1_ref(x1, kernel_size=kernel_size)
    assert out1.shape == ref1.shape == (2, 4, 16, 16), out1.shape
    assert out1.dtype == x1.dtype
    assert jnp.array_equal(out1, ref1), "Pallas output mismatch vs reference (16x16)"

    # Real YOLO-style 13x13 map (L = 169, exercises the plane-packing path).
    x2 = jax.random.normal(k2, (2, 4, 13, 13), dtype=jnp.float32)
    out2 = jax.block_until_ready(maxpool_stride1(x2, kernel_size=kernel_size))
    ref2 = maxpool_stride1_ref(x2, kernel_size=kernel_size)
    assert out2.shape == ref2.shape == (2, 4, 13, 13), out2.shape
    assert jnp.array_equal(out2, ref2), "Pallas output mismatch vs reference (13x13)"

    print("KERNEL_OK")
</pallas_src>

<mosaic_0001>
module attributes {stable_mosaic.version = 11 : i64} {
  func.func @kernel(%arg0: i32, %arg1: memref<1x256xi32, #tpu.memory_space<vmem>>, %arg2: memref<1x256xi32, #tpu.memory_space<vmem>>, %arg3: memref<8x256xf32, #tpu.memory_space<vmem>>, %arg4: memref<8x256xf32, #tpu.memory_space<vmem>>) attributes {dimension_semantics = [#tpu.dimension_semantics<parallel>], iteration_bounds = array<i64: 1>, scalar_prefetch = 0 : i64, scratch_operands = 0 : i64, tpu.core_type = #tpu.core_type<tc>, window_params = [{pipeline_mode = #tpu.pipeline_mode<synchronous>, transform_indices = @transform_0, window_bounds = array<i64: 1, 256>}, {pipeline_mode = #tpu.pipeline_mode<synchronous>, transform_indices = @transform_1, window_bounds = array<i64: 1, 256>}, {transform_indices = @transform_2, window_bounds = array<i64: 8, 256>}, {transform_indices = @transform_3, window_bounds = array<i64: 8, 256>}]} {
    %c0 = arith.constant 0 : index
    %c0_0 = arith.constant 0 : index
    %0 = vector.load %arg1[%c0, %c0_0] : memref<1x256xi32, #tpu.memory_space<vmem>>, vector<1x256xi32>
    %c0_i32 = arith.constant 0 : i32
    %1 = vector.broadcast %c0_i32 : i32 to vector<1x256xi32>
    %2 = arith.cmpi ne, %0, %1 : vector<1x256xi32>
    %c0_1 = arith.constant 0 : index
    %c0_2 = arith.constant 0 : index
    %3 = vector.load %arg2[%c0_1, %c0_2] : memref<1x256xi32, #tpu.memory_space<vmem>>, vector<1x256xi32>
    %c0_i32_3 = arith.constant 0 : i32
    %4 = vector.broadcast %c0_i32_3 : i32 to vector<1x256xi32>
    %5 = arith.cmpi ne, %3, %4 : vector<1x256xi32>
    %c0_4 = arith.constant 0 : index
    %c0_5 = arith.constant 0 : index
    %6 = vector.load %arg3[%c0_4, %c0_5] : memref<8x256xf32, #tpu.memory_space<vmem>>, vector<8x256xf32>
    %c255_i32 = arith.constant 255 : i32
    %7 = tpu.dynamic_rotate %6 by %c255_i32 dim 1 : vector<8x256xf32>, i32 -> vector<8x256xf32>
    %8 = vector.shape_cast %2 : vector<1x256xi1> to vector<1x256xi1>
    %9 = vector.broadcast %8 : vector<1x256xi1> to vector<8x256xi1>
    %10 = arith.select %9, %6, %7 : vector<8x256xi1>, vector<8x256xf32>
    %11 = arith.maximumf %6, %10 : vector<8x256xf32>
    %c240_i32 = arith.constant 240 : i32
    %12 = tpu.dynamic_rotate %11 by %c240_i32 dim 1 : vector<8x256xf32>, i32 -> vector<8x256xf32>
    %13 = vector.shape_cast %5 : vector<1x256xi1> to vector<1x256xi1>
    %14 = vector.broadcast %13 : vector<1x256xi1> to vector<8x256xi1>
    %15 = arith.select %14, %11, %12 : vector<8x256xi1>, vector<8x256xf32>
    %16 = arith.maximumf %11, %15 : vector<8x256xf32>
    %c0_6 = arith.constant 0 : index
    %c0_7 = arith.constant 0 : index
    %17 = vector.load %arg4[%c0_6, %c0_7] : memref<8x256xf32, #tpu.memory_space<vmem>>, vector<8x256xf32>
    tpu.vector_store %arg4[%c0_6, %c0_7], %16 {strides = array<i32>} : memref<8x256xf32, #tpu.memory_space<vmem>>, vector<8x256xf32>,
    return
  }
  func.func @transform_0(%arg0: i32) -> (i32, i32) {
    %c0_i32 = arith.constant 0 : i32
    %c0_i32_0 = arith.constant 0 : i32
    %c0_i32_1 = arith.constant 0 : i32
    return %c0_i32, %c0_i32_0 : i32, i32
  }
  func.func @transform_1(%arg0: i32) -> (i32, i32) {
    %c0_i32 = arith.constant 0 : i32
    %c0_i32_0 = arith.constant 0 : i32
    %c0_i32_1 = arith.constant 0 : i32
    return %c0_i32, %c0_i32_0 : i32, i32
  }
  func.func @transform_2(%arg0: i32) -> (i32, i32) {
    %c0_i32 = arith.constant 0 : i32
    %c0_i32_0 = arith.constant 0 : i32
    return %arg0, %c0_i32 : i32, i32
  }
  func.func @transform_3(%arg0: i32) -> (i32, i32) {
    %c0_i32 = arith.constant 0 : i32
    %c0_i32_0 = arith.constant 0 : i32
    return %arg0, %c0_i32 : i32, i32
  }
}

</mosaic_0001>

<llo_original>
// kernel: maxpool_stride1.1
$region0: #{maxpool_stride1.1}
  #allocation0 [shape = 'u32[]', space=smem, size = 0x4, offset = 0x4, fixed_abs, tag = 'smem constant byte address 0x4 - core index']
  #allocation1 [shape = 'u32[144,128]{1,0:T(1,128)}', space=vmem, size = 0x12000, scoped, tag = 'internal scratch']
  %s0 = inlined_call_operand.vmem [shape: s32[1,256], index: 0, kind: input, shape index: {}]
  %s1 = inlined_call_operand.vmem [shape: s32[1,256], index: 1, kind: input, shape index: {}]
  %s2 = inlined_call_operand.vmem [shape: f32[8,256], index: 2, kind: input, shape index: {}]
  %s3 = inlined_call_operand.vmem [shape: f32[8,256], index: 3, kind: output, shape index: {}]
  %s4 = sld [smem:[#allocation0]]
  $region22: #{maxpool_stride1.1} parent=0
    _
  %s6 = ssub.s32 1, %s4
  %s7 = scalar_select 0, %s6, %s4
  // Predicated region
  $region2: #{maxpool_stride1.1} parent=0 // pred_check
    _
  $region3: #{maxpool_stride1.1} parent=0 // pred_check_branch
    %9 = sbr.rel (0) target = $region5
  $region4: #{maxpool_stride1.1} parent=0 // pred_region
    _
  $region5: #{maxpool_stride1.1} parent=0 // pred_fallthru
    _
  // Predicated region
  $region6: #{maxpool_stride1.1} parent=0 // pred_check
    _
  $region7: #{maxpool_stride1.1} parent=0 // pred_check_branch
    %11 = sbr.rel (0) target = $region9
  $region8: #{maxpool_stride1.1} parent=0 // pred_region
    _
  $region9: #{maxpool_stride1.1} parent=0 // pred_fallthru
    _
  // Predicated region
  $region10: #{maxpool_stride1.1} parent=0 // pred_check
    _
  $region11: #{maxpool_stride1.1} parent=0 // pred_check_branch
    %13 = sbr.rel (0) target = $region13
  $region12: #{maxpool_stride1.1} parent=0 // pred_region
    _
  $region13: #{maxpool_stride1.1} parent=0 // pred_fallthru
    _
  %v14 = vld [vmem:[%s0] sm:$0x3]
  %vm15 = vcmp.ne.s32.totalorder %v14, 0
  %v16 = vld [vmem:[%s1] sm:$0x3]
  %vm17 = vcmp.ne.s32.totalorder %v16, 0
  %v18 = vld [vmem:[%s2] sm:$0xff]
  %v19 = vld [vmem:[%s2 + $0x8] sm:$0xff]
  %20 = vrot.lane.b32.xlu0 %v18, 127
  %v21 = vpop.permute.xlu0 %20
  %22 = vrot.lane.b32.xlu0 %v19, 127
  %v23 = vpop.permute.xlu0 %22
  %v24 = vlaneseq
  %v25 = vand.u32 %v24, 127
  %vm26 = vcmp.lt.s32.totalorder %v25, 127
  %v27 = vsel %vm26, %v21, %v23
  %v28 = vsel %vm26, %v23, %v21
  %v29 = vsel %vm15, 1, 0
  %v30 = vlaneseq
  %v31 = vshrl.u32 %v30, 7
  %v32 = vsub.s32 0, %v31
  %v33 = vrot.slane %v29, %v32
  %v34 = vlaneseq
  %v35 = vshrl.u32 %v34, 7
  %v36 = vsub.s32 1, %v35
  %v37 = vrot.slane %v29, %v36
  %vm38 = vcmp.eq.s32.totalorder %v33, 1
  %vm39 = vcmp.eq.s32.totalorder %v37, 1
  %v40 = vsel %vm38, %v18, %v27
  %v41 = vsel %vm39, %v19, %v28
  %v42 = vmax.f32 %v18, %v40
  %v43 = vmax.f32 %v19, %v41
  %44 = vrot.lane.b32.xlu0 %v42, 112
  %v45 = vpop.permute.xlu0 %44
  %46 = vrot.lane.b32.xlu0 %v43, 112
  %v47 = vpop.permute.xlu0 %46
  %vm48 = vcmp.lt.s32.totalorder %v25, 112
  %v49 = vsel %vm48, %v45, %v47
  %v50 = vsel %vm48, %v47, %v45
  %v51 = vsel %vm17, 1, 0
  %v52 = vlaneseq
  %v53 = vshrl.u32 %v52, 7
  %v54 = vsub.s32 0, %v53
  %v55 = vrot.slane %v51, %v54
  %v56 = vlaneseq
  %v57 = vshrl.u32 %v56, 7
  %v58 = vsub.s32 1, %v57
  %v59 = vrot.slane %v51, %v58
  %vm60 = vcmp.eq.s32.totalorder %v55, 1
  %vm61 = vcmp.eq.s32.totalorder %v59, 1
  %v62 = vsel %vm60, %v42, %v49
  %v63 = vsel %vm61, %v43, %v50
  %v64 = vmax.f32 %v42, %v62
  %v65 = vmax.f32 %v43, %v63
  %66 = vst [vmem:[%s3] sm:$0xff] %v64
  %67 = vst [vmem:[%s3 + $0x8] sm:$0xff] %v65
  // Predicated region
  $region14: #{maxpool_stride1.1} parent=0 // pred_check
    _
  $region15: #{maxpool_stride1.1} parent=0 // pred_check_branch
    %69 = sbr.rel (0) target = $region17
  $region16: #{maxpool_stride1.1} parent=0 // pred_region
    _
  $region17: #{maxpool_stride1.1} parent=0 // pred_fallthru
    _
  // Predicated region
  $region18: #{maxpool_stride1.1} parent=0 // pred_check
    _
  $region19: #{maxpool_stride1.1} parent=0 // pred_check_branch
    %71 = sbr.rel (0) target = $region21
  $region20: #{maxpool_stride1.1} parent=0 // pred_region
    _
  $region21: #{maxpool_stride1.1} parent=0 // pred_fallthru
    _

</llo_original>
